<compile_context>
chip_gen: v5e
topology: v5e:2x2
jax: 0.10.0
libtpu: 0.0.40
codegen_flags: <defaults>
</compile_context>

<pallas_src>
import jax
import jax.numpy as jnp
from jax.experimental import pallas as pl
from jax.experimental.pallas import tpu as pltpu


def _add_centrality_kernel(cent_ref, x_ref, o_ref):
    # cent_ref: (1, TF); x_ref / o_ref: (TB, TF). Broadcast over sublanes.
    o_ref[...] = x_ref[...] + cent_ref[...]


def _round_up(x, m):
    return ((x + m - 1) // m) * m


def _choose_tiles(batch, f_pad, itemsize, target_bytes=2 << 20):
    """Pick (TB, TF): ~target_bytes per buffer, (8,128)-legal block shapes."""
    row8_bytes = 8 * f_pad * itemsize          # one 8-sublane slab of a full row
    if row8_bytes <= target_bytes:
        # Whole (padded) rows are cheap: tile the batch axis only.
        tf = f_pad
        tb = (target_bytes // (f_pad * itemsize)) // 8 * 8
        tb = batch if tb >= batch else max(8, tb)
        return tb, tf
    # A single 8-row slab already exceeds the target: tile F as well.
    tb = 64 if batch > 64 else batch           # full extent, or a multiple of 8
    tf = (target_bytes // (max(tb, 8) * itemsize)) // 128 * 128
    tf = max(128, min(tf, f_pad))
    return tb, tf


def centrality_encoder(x, in_degree, out_degree, z_in, z_out):
    """x: (B1, B2, N, d); in/out_degree: (N,) int; z_*: (K, d) float."""
    B1, B2, N, d = x.shape
    assert in_degree.shape[0] == N and out_degree.shape[0] == N, \
        "Node dimensions does not match"
    assert d == z_in.shape[1] == z_out.shape[1], \
        "Feature embedd dimensions does not match"

    B = B1 * B2
    F = N * d
    F_pad = _round_up(F, 128)                  # lane-dense stores for any N*d

    # Grid-invariant gather hoisted into the wrapper (computed once).
    # TODO(synk): like nn.Embedding, assumes degrees are in-range; jnp.take
    # clamps out-of-range indices instead of raising.
    cent = (jnp.take(z_in, in_degree.astype(jnp.int32), axis=0)
            + jnp.take(z_out, out_degree.astype(jnp.int32), axis=0))
    # PyTorch's in-place `x += centrality` keeps x's dtype: add in x.dtype.
    cent_row = cent.astype(x.dtype).reshape(1, F)
    x_flat = x.reshape(B, F)
    if F_pad != F:
        x_flat = jnp.pad(x_flat, ((0, 0), (0, F_pad - F)))
        cent_row = jnp.pad(cent_row, ((0, 0), (0, F_pad - F)))

    itemsize = jnp.dtype(x.dtype).itemsize
    TB, TF = _choose_tiles(B, F_pad, itemsize)
    grid = (pl.cdiv(B, TB), pl.cdiv(F_pad, TF))

    # Explicit VMEM budget: double-buffered x-in / out tiles plus the
    # 8-sublane-padded (1, TF) centrality buffer (worst case 2 buffers).
    x_tile_bytes = TB * TF * itemsize
    cent_buf_bytes = 8 * TF * itemsize
    vmem_needed = 4 * x_tile_bytes + 2 * cent_buf_bytes
    vmem_limit = int(min(48 << 20, max(16 << 20, 2 * vmem_needed)))

    cost = pl.CostEstimate(
        flops=B * F_pad,
        transcendentals=0,
        bytes_accessed=(2 * B * F_pad + F_pad) * itemsize,
    )

    def build_call(cent_spec):
        return pl.pallas_call(
            _add_centrality_kernel,
            out_shape=jax.ShapeDtypeStruct((B, F_pad), x.dtype),
            grid_spec=pltpu.PrefetchScalarGridSpec(
                num_scalar_prefetch=0,
                grid=grid,
                in_specs=[
                    cent_spec,                                    # centrality row
                    pl.BlockSpec((TB, TF), lambda b, f: (b, f)),  # x tile
                ],
                out_specs=pl.BlockSpec((TB, TF), lambda b, f: (b, f)),
            ),
            compiler_params=pltpu.CompilerParams(
                dimension_semantics=("parallel", "parallel"),
                vmem_limit_bytes=vmem_limit,
            ),
            cost_estimate=cost,
            # x_flat (input index 1) aliases output 0: in-place when donatable.
            input_output_aliases={1: 0},
        )

    try:
        # Constant-per-outer-step block: a single pipeline buffer is enough.
        cent_spec = pl.BlockSpec((1, TF), lambda b, f: (0, f),
                                 pipeline_mode=pl.Buffered(1))
        out = build_call(cent_spec)(cent_row, x_flat)
    except Exception:
        # Graceful fallback if this jax build rejects single-buffer pipelining
        # (costs at most one extra small VMEM buffer; semantics unchanged).
        cent_spec = pl.BlockSpec((1, TF), lambda b, f: (0, f))
        out = build_call(cent_spec)(cent_row, x_flat)

    if F_pad != F:
        out = out[:, :F]
    return out.reshape(B1, B2, N, d)


if __name__ == "__main__":
    key = jax.random.PRNGKey(0)
    k_x, k_in, k_out, k_zin, k_zout = jax.random.split(key, 5)

    # Small shapes: batch=2, heads=4, nodes=8, embedding=32
    B1, B2, N, d = 2, 4, 8, 32
    max_in_degree, max_out_degree = 5, 7

    x = jax.random.normal(k_x, (B1, B2, N, d), dtype=jnp.float32)
    in_degree = jax.random.randint(k_in, (N,), 0, max_in_degree + 1, dtype=jnp.int32)
    out_degree = jax.random.randint(k_out, (N,), 0, max_out_degree + 1, dtype=jnp.int32)

    # Deterministic parameter init (nn.Embedding default ~ N(0, 1))
    z_in = jax.random.normal(k_zin, (max_in_degree + 1, d), dtype=jnp.float32)
    z_out = jax.random.normal(k_zout, (max_out_degree + 1, d), dtype=jnp.float32)

    y = centrality_encoder(x, in_degree, out_degree, z_in, z_out)
    y = jax.block_until_ready(y)

    # Pure-JAX reference check
    ref = x + (z_in[in_degree] + z_out[out_degree])[None, None, :, :]
    assert jnp.allclose(y, ref, atol=1e-5, rtol=1e-5), "mismatch vs reference"

    print("KERNEL_OK")
</pallas_src>

<mosaic_0001>
module attributes {stable_mosaic.version = 11 : i64} {
  func.func @_add_centrality_kernel(%arg0: i32, %arg1: i32, %arg2: memref<1x256xf32, #tpu.memory_space<vmem>>, %arg3: memref<8x256xf32, #tpu.memory_space<vmem>>, %arg4: memref<8x256xf32, #tpu.memory_space<vmem>>) attributes {dimension_semantics = [#tpu.dimension_semantics<parallel>, #tpu.dimension_semantics<parallel>], iteration_bounds = array<i64: 1, 1>, scalar_prefetch = 0 : i64, scratch_operands = 0 : i64, tpu.core_type = #tpu.core_type<tc>, window_params = [{pipeline_mode = #tpu.pipeline_mode<synchronous>, transform_indices = @transform_0, window_bounds = array<i64: 1, 256>}, {transform_indices = @transform_1, window_bounds = array<i64: 8, 256>}, {transform_indices = @transform_2, window_bounds = array<i64: 8, 256>}]} {
    %c0 = arith.constant 0 : index
    %c0_0 = arith.constant 0 : index
    %0 = vector.load %arg3[%c0, %c0_0] : memref<8x256xf32, #tpu.memory_space<vmem>>, vector<8x256xf32>
    %c0_1 = arith.constant 0 : index
    %c0_2 = arith.constant 0 : index
    %1 = vector.load %arg2[%c0_1, %c0_2] : memref<1x256xf32, #tpu.memory_space<vmem>>, vector<1x256xf32>
    %2 = vector.broadcast %1 : vector<1x256xf32> to vector<8x256xf32>
    %3 = arith.addf %0, %2 : vector<8x256xf32>
    %c0_3 = arith.constant 0 : index
    %c0_4 = arith.constant 0 : index
    %4 = vector.load %arg4[%c0_3, %c0_4] : memref<8x256xf32, #tpu.memory_space<vmem>>, vector<8x256xf32>
    tpu.vector_store %arg4[%c0_3, %c0_4], %3 {strides = array<i32>} : memref<8x256xf32, #tpu.memory_space<vmem>>, vector<8x256xf32>,
    return
  }
  func.func @transform_0(%arg0: i32, %arg1: i32) -> (i32, i32) {
    %c0_i32 = arith.constant 0 : i32
    %c0_i32_0 = arith.constant 0 : i32
    return %c0_i32, %arg1 : i32, i32
  }
  func.func @transform_1(%arg0: i32, %arg1: i32) -> (i32, i32) {
    %c0_i32 = arith.constant 0 : i32
    return %arg0, %arg1 : i32, i32
  }
  func.func @transform_2(%arg0: i32, %arg1: i32) -> (i32, i32) {
    %c0_i32 = arith.constant 0 : i32
    return %arg0, %arg1 : i32, i32
  }
}

module attributes {stable_mosaic.version = 11 : i64} {
  func.func @_add_centrality_kernel(%arg0: i32, %arg1: i32, %arg2: memref<1x256xf32, #tpu.memory_space<vmem>>, %arg3: memref<8x256xf32, #tpu.memory_space<vmem>>, %arg4: memref<8x256xf32, #tpu.memory_space<vmem>>) attributes {dimension_semantics = [#tpu.dimension_semantics<parallel>, #tpu.dimension_semantics<parallel>], iteration_bounds = array<i64: 1, 1>, scalar_prefetch = 0 : i64, scratch_operands = 0 : i64, tpu.core_type = #tpu.core_type<tc>, window_params = [{transform_indices = @transform_0, window_bounds = array<i64: 1, 256>}, {transform_indices = @transform_1, window_bounds = array<i64: 8, 256>}, {transform_indices = @transform_2, window_bounds = array<i64: 8, 256>}]} {
    %c0 = arith.constant 0 : index
    %c0_0 = arith.constant 0 : index
    %0 = vector.load %arg3[%c0, %c0_0] : memref<8x256xf32, #tpu.memory_space<vmem>>, vector<8x256xf32>
    %c0_1 = arith.constant 0 : index
    %c0_2 = arith.constant 0 : index
    %1 = vector.load %arg2[%c0_1, %c0_2] : memref<1x256xf32, #tpu.memory_space<vmem>>, vector<1x256xf32>
    %2 = vector.broadcast %1 : vector<1x256xf32> to vector<8x256xf32>
    %3 = arith.addf %0, %2 : vector<8x256xf32>
    %c0_3 = arith.constant 0 : index
    %c0_4 = arith.constant 0 : index
    %4 = vector.load %arg4[%c0_3, %c0_4] : memref<8x256xf32, #tpu.memory_space<vmem>>, vector<8x256xf32>
    tpu.vector_store %arg4[%c0_3, %c0_4], %3 {strides = array<i32>} : memref<8x256xf32, #tpu.memory_space<vmem>>, vector<8x256xf32>,
    return
  }
  func.func @transform_0(%arg0: i32, %arg1: i32) -> (i32, i32) {
    %c0_i32 = arith.constant 0 : i32
    %c0_i32_0 = arith.constant 0 : i32
    return %c0_i32, %arg1 : i32, i32
  }
  func.func @transform_1(%arg0: i32, %arg1: i32) -> (i32, i32) {
    %c0_i32 = arith.constant 0 : i32
    return %arg0, %arg1 : i32, i32
  }
  func.func @transform_2(%arg0: i32, %arg1: i32) -> (i32, i32) {
    %c0_i32 = arith.constant 0 : i32
    return %arg0, %arg1 : i32, i32
  }
}

</mosaic_0001>

<llo_original>
// kernel: tpu_custom_call.1
$region0: #{tpu_custom_call.1}
  #allocation0 [shape = 'u32[]', space=smem, size = 0x4, offset = 0x4, fixed_abs, tag = 'smem constant byte address 0x4 - core index']
  #allocation1 [shape = 'u32[72,128]{1,0:T(1,128)}', space=vmem, size = 0x9000, scoped, tag = 'internal scratch']
  %s0 = inlined_call_operand.vmem [shape: f32[1,256], index: 0, kind: input, shape index: {}]
  %s1 = inlined_call_operand.hbm [shape: f32[8,256], index: 1, kind: input, shape index: {}, may-alias: {1,2}]
  %s2 = inlined_call_operand.hbm [shape: f32[8,256], index: 2, kind: output, shape index: {}, may-alias: {1,2}]
  %s3 = sld [smem:[#allocation0]]
  $region22: #{tpu_custom_call.1} parent=0
    _
  %s5 = ssub.s32 1, %s3
  %s6 = scalar_select 0, %s5, %s3
  $region1: #{tpu_custom_call.1} parent=0
    #allocation2 [shape = 'u8[8192]{0}', space=vmem, size = 0x2000, scoped, tag = 'input window, operand 1, single buffered']
    #allocation3 [shape = 's32[1]{0}', space=sflag, size = 0x4, scoped, tag = 'scoped memory for tpu_custom_call.1']
    #allocation4 [shape = 's32[1]{0}', space=sflag, size = 0x4, scoped, tag = 'scoped memory for tpu_custom_call.1']
    #allocation5 [shape = 'u8[8192]{0}', space=vmem, size = 0x2000, scoped, tag = 'output window, operand 0, single buffered']
    %7 = vsyncpa [#allocation3], 0
    %8 = vsyncpa [#allocation4], 0
    // Predicated region
    $region2: #{tpu_custom_call.1} parent=1 // pred_check
      _
    $region3: #{tpu_custom_call.1} parent=1 // pred_check_branch
      %10 = sbr.rel (0) target = $region5
    $region4: #{tpu_custom_call.1} parent=1 // pred_region
      _
    $region5: #{tpu_custom_call.1} parent=1 // pred_fallthru
      _
    // Predicated region
    $region6: #{tpu_custom_call.1} parent=1 // pred_check
      _
    $region7: #{tpu_custom_call.1} parent=1 // pred_check_branch
      %12 = sbr.rel (0) target = $region9
    $region8: #{tpu_custom_call.1} parent=1 // pred_region
      %14 = vsyncadd [#allocation3], 0
      %s16 = sshll.u32 %s1, 4
      %s17 = int_to_ptr.hbm [resolvable:$true] %s16
      %s18 = sshll.u32 [#allocation2], 4
      %s19 = int_to_ptr.vmem [resolvable:$true] %s18
      %21 = dma.hbm_to_vmem [thread:$0]  %s17, 256, %s19, [#allocation3]
    $region9: #{tpu_custom_call.1} parent=1 // pred_fallthru
      _
    // Predicated region
    $region10: #{tpu_custom_call.1} parent=1 // pred_check
      _
    $region11: #{tpu_custom_call.1} parent=1 // pred_check_branch
      %23 = sbr.rel (0) target = $region13
    $region12: #{tpu_custom_call.1} parent=1 // pred_region
      %25 = dma.done [#allocation3], 256
    $region13: #{tpu_custom_call.1} parent=1 // pred_fallthru
      _
    %v26 = vld [vmem:[#allocation2] sm:$0xff]
    %v27 = vld [vmem:[#allocation2 + $0x8] sm:$0xff]
    %v28 = vld [vmem:[%s0] sm:$0x3]
    %v30 = vperm.slane %v28, 0
    %v31 = vperm.slane %v28, 1
    %v34 = vadd.f32 %v26, %v30
    %v35 = vadd.f32 %v27, %v31
    %36 = vst [vmem:[#allocation5] sm:$0xff] %v34
    %37 = vst [vmem:[#allocation5 + $0x8] sm:$0xff] %v35
    // Predicated region
    $region14: #{tpu_custom_call.1} parent=1 // pred_check
      _
    $region15: #{tpu_custom_call.1} parent=1 // pred_check_branch
      %39 = sbr.rel (0) target = $region17
    $region16: #{tpu_custom_call.1} parent=1 // pred_region
      %41 = vsyncadd [#allocation4], 0
      %s43 = sshll.u32 [#allocation5], 4
      %s44 = int_to_ptr.vmem [resolvable:$true] %s43
      %s45 = sshll.u32 %s2, 4
      %s46 = int_to_ptr.hbm [resolvable:$true] %s45
      %48 = dma.vmem_to_hbm [thread:$0]  %s44, 256, %s46, [#allocation4]
    $region17: #{tpu_custom_call.1} parent=1 // pred_fallthru
      _
    // Predicated region
    $region18: #{tpu_custom_call.1} parent=1 // pred_check
      _
    $region19: #{tpu_custom_call.1} parent=1 // pred_check_branch
      %50 = sbr.rel (0) target = $region21
    $region20: #{tpu_custom_call.1} parent=1 // pred_region
      %52 = dma.done [#allocation4], 256
    $region21: #{tpu_custom_call.1} parent=1 // pred_fallthru
      _
    %53 = vsyncpa [#allocation3], 1
    %54 = vsyncpa [#allocation4], 1

// kernel: tpu_custom_call.1
$region0: #{tpu_custom_call.1}
  #allocation0 [shape = 'u32[]', space=smem, size = 0x4, offset = 0x4, fixed_abs, tag = 'smem constant byte address 0x4 - core index']
  #allocation1 [shape = 'u32[72,128]{1,0:T(1,128)}', space=vmem, size = 0x9000, scoped, tag = 'internal scratch']
  %s0 = inlined_call_operand.vmem [shape: f32[1,256], index: 0, kind: input, shape index: {}]
  %s1 = inlined_call_operand.hbm [shape: f32[8,256], index: 1, kind: input, shape index: {}, may-alias: {1,2}]
  %s2 = inlined_call_operand.hbm [shape: f32[8,256], index: 2, kind: output, shape index: {}, may-alias: {1,2}]
  %s3 = sld [smem:[#allocation0]]
  $region22: #{tpu_custom_call.1} parent=0
    _
  %s5 = ssub.s32 1, %s3
  %s6 = scalar_select 0, %s5, %s3
  $region1: #{tpu_custom_call.1} parent=0
    #allocation2 [shape = 'u8[8192]{0}', space=vmem, size = 0x2000, scoped, tag = 'input window, operand 1, single buffered']
    #allocation3 [shape = 's32[1]{0}', space=sflag, size = 0x4, scoped, tag = 'scoped memory for tpu_custom_call.1']
    #allocation4 [shape = 's32[1]{0}', space=sflag, size = 0x4, scoped, tag = 'scoped memory for tpu_custom_call.1']
    #allocation5 [shape = 'u8[8192]{0}', space=vmem, size = 0x2000, scoped, tag = 'output window, operand 0, single buffered']
    %7 = vsyncpa [#allocation3], 0
    %8 = vsyncpa [#allocation4], 0
    // Predicated region
    $region2: #{tpu_custom_call.1} parent=1 // pred_check
      _
    $region3: #{tpu_custom_call.1} parent=1 // pred_check_branch
      %10 = sbr.rel (0) target = $region5
    $region4: #{tpu_custom_call.1} parent=1 // pred_region
      _
    $region5: #{tpu_custom_call.1} parent=1 // pred_fallthru
      _
    // Predicated region
    $region6: #{tpu_custom_call.1} parent=1 // pred_check
      _
    $region7: #{tpu_custom_call.1} parent=1 // pred_check_branch
      %12 = sbr.rel (0) target = $region9
    $region8: #{tpu_custom_call.1} parent=1 // pred_region
      %14 = vsyncadd [#allocation3], 0
      %s16 = sshll.u32 %s1, 4
      %s17 = int_to_ptr.hbm [resolvable:$true] %s16
      %s18 = sshll.u32 [#allocation2], 4
      %s19 = int_to_ptr.vmem [resolvable:$true] %s18
      %21 = dma.hbm_to_vmem [thread:$0]  %s17, 256, %s19, [#allocation3]
    $region9: #{tpu_custom_call.1} parent=1 // pred_fallthru
      _
    // Predicated region
    $region10: #{tpu_custom_call.1} parent=1 // pred_check
      _
    $region11: #{tpu_custom_call.1} parent=1 // pred_check_branch
      %23 = sbr.rel (0) target = $region13
    $region12: #{tpu_custom_call.1} parent=1 // pred_region
      %25 = dma.done [#allocation3], 256
    $region13: #{tpu_custom_call.1} parent=1 // pred_fallthru
      _
    %v26 = vld [vmem:[#allocation2] sm:$0xff]
    %v27 = vld [vmem:[#allocation2 + $0x8] sm:$0xff]
    %v28 = vld [vmem:[%s0] sm:$0x3]
    %v30 = vperm.slane %v28, 0
    %v31 = vperm.slane %v28, 1
    %v34 = vadd.f32 %v26, %v30
    %v35 = vadd.f32 %v27, %v31
    %36 = vst [vmem:[#allocation5] sm:$0xff] %v34
    %37 = vst [vmem:[#allocation5 + $0x8] sm:$0xff] %v35
    // Predicated region
    $region14: #{tpu_custom_call.1} parent=1 // pred_check
      _
    $region15: #{tpu_custom_call.1} parent=1 // pred_check_branch
      %39 = sbr.rel (0) target = $region17
    $region16: #{tpu_custom_call.1} parent=1 // pred_region
      %41 = vsyncadd [#allocation4], 0
      %s43 = sshll.u32 [#allocation5], 4
      %s44 = int_to_ptr.vmem [resolvable:$true] %s43
      %s45 = sshll.u32 %s2, 4
      %s46 = int_to_ptr.hbm [resolvable:$true] %s45
      %48 = dma.vmem_to_hbm [thread:$0]  %s44, 256, %s46, [#allocation4]
    $region17: #{tpu_custom_call.1} parent=1 // pred_fallthru
      _
    // Predicated region
    $region18: #{tpu_custom_call.1} parent=1 // pred_check
      _
    $region19: #{tpu_custom_call.1} parent=1 // pred_check_branch
      %50 = sbr.rel (0) target = $region21
    $region20: #{tpu_custom_call.1} parent=1 // pred_region
      %52 = dma.done [#allocation4], 256
    $region21: #{tpu_custom_call.1} parent=1 // pred_fallthru
      _
    %53 = vsyncpa [#allocation3], 1
    %54 = vsyncpa [#allocation4], 1

</llo_original>
